<compile_context>
chip_gen: v5e
topology: v5e:2x2
jax: 0.10.0
libtpu: 0.0.40
codegen_flags: <defaults>
</compile_context>

<pallas_src>
import functools

import jax
import jax.numpy as jnp
from jax import lax
from jax.experimental import pallas as pl
from jax.experimental.pallas import tpu as pltpu


def _round_up(x, m):
    return (x + m - 1) // m * m


def _asoftmax_kernel(n_actual, c_actual, gamma,
                     tgt_ref, blend_ref, cos_ref,
                     loss_ref, m_sc, l_sc):
    """Grid = (batch_tiles, class_tiles); online softmax carried over class axis.

    Only the cos plane is streamed; the blended target-column logit is
    precomputed in the wrapper and folded back in at the finalize step.
    """
    b = pl.program_id(0)
    c = pl.program_id(1)
    num_c = pl.num_programs(1)

    @pl.when(c == 0)
    def _init():
        # Large finite negative (not -inf) so the all-masked degenerate case
        # can never produce inf - inf = nan in the carried state.
        m_sc[...] = jnp.full_like(m_sc, -3.0e38)
        l_sc[...] = jnp.zeros_like(l_sc)

    cos = cos_ref[...].astype(jnp.float32)                    # [tn, tc]
    tn, tc = cos.shape

    col = lax.broadcasted_iota(jnp.int32, (tn, tc), 1)        # local column id
    tgt_local = tgt_ref[...] - c * tc                         # [tn,1] shift (no full-tile add)
    mask = col == tgt_local                                   # exclude target column
    if c_actual % tc != 0:                                    # static: class padding exists
        mask = mask | (col >= (c_actual - c * tc))
    x = jnp.where(mask, -jnp.inf, cos)
    if n_actual % tn != 0:                                    # static: batch padding exists
        row = b * tn + lax.broadcasted_iota(jnp.int32, (tn, 1), 0)
        x = jnp.where(row < n_actual, x, 0.0)                 # keep padded rows finite

    # Online softmax denominator over the (non-target) class columns.
    m_prev = m_sc[...]
    m_new = jnp.maximum(m_prev, jnp.max(x, axis=1, keepdims=True))
    l_sc[...] = (l_sc[...] * jnp.exp(m_prev - m_new)
                 + jnp.sum(jnp.exp(x - m_new), axis=1, keepdims=True))
    m_sc[...] = m_new

    @pl.when(c == num_c - 1)
    def _finalize():
        blend = blend_ref[...]                                # [tn,1] pre-softmax target logit
        m = m_sc[...]
        m_all = jnp.maximum(m, blend)                         # joint max -> no cancellation
        l_all = l_sc[...] * jnp.exp(m - m_all) + jnp.exp(blend - m_all)
        logit_t = blend - m_all - jnp.log(l_all)              # log p_t
        if gamma == 0:
            per = -logit_t                                    # skip pow entirely
        else:
            pt = jnp.exp(logit_t)
            base = jnp.maximum(1.0 - pt, 0.0)                 # clamp vs rounding
            g = int(gamma) if float(gamma).is_integer() else gamma
            per = -(base ** g) * logit_t
        if n_actual % tn != 0:
            row = b * tn + lax.broadcasted_iota(jnp.int32, (tn, 1), 0)
            per = jnp.where(row < n_actual, per, 0.0)         # padded rows -> 0
        loss_ref[...] = per


def angular_softmax_loss(stacked, target, lamb, gamma=0,
                         batch_tile=256, class_tile=2048):
    """stacked: [2, N, C] (cos_theta, phi_theta), any float dtype; target: [N] int."""
    two, n, c = stacked.shape
    assert two == 2
    itemsize = jnp.dtype(stacked.dtype).itemsize
    sublane = max(8, 32 // max(itemsize, 1))   # 8 for f32, 16 for bf16, 32 for int8/fp8
    assert batch_tile % sublane == 0 and class_tile % 128 == 0

    tn = min(_round_up(n, sublane), batch_tile)
    if n > sublane:
        # Cap tn so nb >= 2: the "parallel" batch axis then splits across both
        # v7x TensorCores even for small N (class axis is the carried reduction).
        tn = min(tn, _round_up(-(-n // 2), sublane))
    tc = min(_round_up(c, 128), class_tile)    # lane-dense class tile
    nb = pl.cdiv(n, tn)
    nc = pl.cdiv(c, tc)
    n_pad = nb * tn

    target = target.astype(jnp.int32)
    # Gather the target column of both planes in plain JAX (N elements each) so
    # the kernel only streams the cos plane -> ~2x less HBM traffic.
    cos_t = jnp.take_along_axis(stacked[0], target[:, None], axis=1).astype(jnp.float32)
    phi_t = jnp.take_along_axis(stacked[1], target[:, None], axis=1).astype(jnp.float32)
    scale = 1.0 / (1.0 + lamb)                      # precomputed once in the wrapper
    blend_t = cos_t + (phi_t - cos_t) * scale       # pre-softmax target logit, [N,1] f32

    tgt = jnp.zeros((n_pad, 1), jnp.int32).at[:n, 0].set(target)
    blend = jnp.zeros((n_pad, 1), jnp.float32).at[:n].set(blend_t)

    kernel = functools.partial(_asoftmax_kernel, n, c, gamma)

    # Working set: double-buffered cos tile + f32 intermediates + margin.
    vmem_need = 2 * tn * tc * itemsize + 3 * tn * tc * 4 + (2 << 20)

    per_sample = pl.pallas_call(
        kernel,
        out_shape=jax.ShapeDtypeStruct((n_pad, 1), jnp.float32),
        grid_spec=pltpu.PrefetchScalarGridSpec(
            num_scalar_prefetch=0,
            grid=(nb, nc),
            in_specs=[
                pl.BlockSpec((tn, 1), lambda b, cc: (b, 0)),              # target index
                pl.BlockSpec((tn, 1), lambda b, cc: (b, 0)),              # blended target logit
                pl.BlockSpec((None, tn, tc), lambda b, cc: (0, b, cc)),   # cos plane only
            ],
            out_specs=pl.BlockSpec((tn, 1), lambda b, cc: (b, 0)),
            scratch_shapes=[pltpu.VMEM((tn, 1), jnp.float32),   # running max m
                            pltpu.VMEM((tn, 1), jnp.float32)],  # running sum l
        ),
        compiler_params=pltpu.CompilerParams(
            dimension_semantics=("parallel", "arbitrary"),
            vmem_limit_bytes=max(vmem_need, 16 * 1024 * 1024)),
        cost_estimate=pl.CostEstimate(
            flops=6 * n * c,
            transcendentals=n * c,
            bytes_accessed=n * c * itemsize + n_pad * 12),
    )(tgt, blend, stacked)

    # Final mean over the true batch size (padded rows contribute exactly 0).
    return jnp.sum(per_sample) / n


class AngularSoftmaxWithLoss:
    """Python-state wrapper mirroring the nn.Module (iter counter, lambda anneal)."""

    def __init__(self, gamma=0, batch_tile=256, class_tile=2048):
        self.gamma = gamma
        self.iter = 0
        self.lambda_min = 5.0
        self.lambda_max = 1500.0
        self.lamb = 1500.0
        self.batch_tile = batch_tile
        self.class_tile = class_tile

    def __call__(self, inp, target):
        # inp: [2, N, C] stacked (cos_theta, phi_theta); target: [N] int
        self.iter += 1
        self.lamb = max(self.lambda_min,
                        self.lambda_max / (1.0 + 0.1 * self.iter))
        return angular_softmax_loss(inp, target, self.lamb, self.gamma,
                                    batch_tile=self.batch_tile,
                                    class_tile=self.class_tile)


def _reference(stacked, target, lamb, gamma):
    """Pure-JAX reference for a correctness check."""
    cos = stacked[0].astype(jnp.float32)
    phi = stacked[1].astype(jnp.float32)
    c = cos.shape[1]
    onehot = jax.nn.one_hot(target, c, dtype=cos.dtype)
    out = cos + onehot * (phi - cos) / (1.0 + lamb)
    log_sm = jax.nn.log_softmax(out, axis=1)
    logit_t = jnp.take_along_axis(log_sm, target[:, None], axis=1).reshape(-1)
    pt = jnp.exp(logit_t)
    return jnp.mean(-1.0 * (1.0 - pt) ** gamma * logit_t)


if __name__ == "__main__":
    key = jax.random.PRNGKey(0)
    k1, k2, k3 = jax.random.split(key, 3)

    # Small shapes that still exercise batch tiling, class tiling (online
    # softmax), and padding/masking on both axes: N=20 rows, C=200 classes.
    N, C = 20, 200
    cos_theta = jax.random.normal(k1, (N, C), dtype=jnp.float32)
    phi_theta = jax.random.normal(k2, (N, C), dtype=jnp.float32)
    target = jax.random.randint(k3, (N,), 0, C, dtype=jnp.int32)
    inp = jnp.stack([cos_theta, phi_theta], axis=0)        # [2, N, C]

    # 1) f32 path through the module wrapper (gamma=0): small tiles force
    #    grid=(3, 2) with both batch- and class-axis padding masks active.
    loss_mod = AngularSoftmaxWithLoss(gamma=0, batch_tile=8, class_tile=128)
    loss = loss_mod(inp, target)
    loss = jax.block_until_ready(loss)
    ref = _reference(inp, target, loss_mod.lamb, loss_mod.gamma)
    assert jnp.allclose(loss, ref, rtol=1e-4, atol=1e-5), (loss, ref)

    # 2) bf16 path (native-dtype DMA, in-kernel upcast) with integer gamma=2;
    #    bf16 requires 16-row sublane alignment (batch_tile=16).
    inp_bf16 = inp.astype(jnp.bfloat16)
    loss_bf = angular_softmax_loss(inp_bf16, target, lamb=37.5, gamma=2,
                                   batch_tile=16, class_tile=128)
    loss_bf = jax.block_until_ready(loss_bf)
    ref_bf = _reference(inp_bf16, target, 37.5, 2)
    assert jnp.allclose(loss_bf, ref_bf, rtol=1e-3, atol=1e-4), (loss_bf, ref_bf)

    # 3) default (large) tiles: single class tile (nc=1) path, nb>=2 cap active.
    loss_def = angular_softmax_loss(inp, target, lamb=5.0, gamma=0)
    loss_def = jax.block_until_ready(loss_def)
    ref_def = _reference(inp, target, 5.0, 0)
    assert jnp.allclose(loss_def, ref_def, rtol=1e-4, atol=1e-5), (loss_def, ref_def)

    print("KERNEL_OK")
</pallas_src>

<mosaic_0001>
module attributes {stable_mosaic.version = 11 : i64} {
  func.func @_asoftmax_kernel(%arg0: i32, %arg1: i32, %arg2: memref<8x1xi32, #tpu.memory_space<vmem>>, %arg3: memref<8x1xf32, #tpu.memory_space<vmem>>, %arg4: memref<1x8x128xf32, #tpu.memory_space<vmem>>, %arg5: memref<8x1xf32, #tpu.memory_space<vmem>>, %arg6: memref<8x1xf32, #tpu.memory_space<vmem>>, %arg7: memref<8x1xf32, #tpu.memory_space<vmem>>) attributes {dimension_semantics = [#tpu.dimension_semantics<parallel>, #tpu.dimension_semantics<arbitrary>], iteration_bounds = array<i64: 3, 2>, scalar_prefetch = 0 : i64, scratch_operands = 2 : i64, tpu.core_type = #tpu.core_type<tc>, window_params = [{transform_indices = @transform_0, window_bounds = array<i64: 8, 1>}, {transform_indices = @transform_1, window_bounds = array<i64: 8, 1>}, {transform_indices = @transform_2, window_bounds = array<i64: 1, 8, 128>}, {transform_indices = @transform_3, window_bounds = array<i64: 8, 1>}]} {
    %c0_i32 = arith.constant 0 : i32
    %0 = arith.cmpi eq, %arg1, %c0_i32 : i32
    %1 = arith.extui %0 : i1 to i32
    %c0_i32_0 = arith.constant 0 : i32
    %2 = arith.cmpi ne, %1, %c0_i32_0 : i32
    scf.if %2 {
      %cst_18 = arith.constant -3.000000e+38 : f32
      %48 = vector.broadcast %cst_18 : f32 to vector<8x1xf32>
      %c0_19 = arith.constant 0 : index
      %c0_20 = arith.constant 0 : index
      %49 = vector.load %arg6[%c0_19, %c0_20] : memref<8x1xf32, #tpu.memory_space<vmem>>, vector<8x1xf32>
      tpu.vector_store %arg6[%c0_19, %c0_20], %48 {strides = array<i32>} : memref<8x1xf32, #tpu.memory_space<vmem>>, vector<8x1xf32>,
      %cst_21 = arith.constant 0.000000e+00 : f32
      %50 = vector.broadcast %cst_21 : f32 to vector<8x1xf32>
      %c0_22 = arith.constant 0 : index
      %c0_23 = arith.constant 0 : index
      %51 = vector.load %arg7[%c0_22, %c0_23] : memref<8x1xf32, #tpu.memory_space<vmem>>, vector<8x1xf32>
      tpu.vector_store %arg7[%c0_22, %c0_23], %50 {strides = array<i32>} : memref<8x1xf32, #tpu.memory_space<vmem>>, vector<8x1xf32>,
    } else {
    }
    %c0 = arith.constant 0 : index
    %c0_1 = arith.constant 0 : index
    %c0_2 = arith.constant 0 : index
    %3 = vector.load %arg4[%c0, %c0_1, %c0_2] : memref<1x8x128xf32, #tpu.memory_space<vmem>>, vector<1x8x128xf32>
    %4 = vector.shape_cast %3 : vector<1x8x128xf32> to vector<8x128xf32>
    %5 = tpu.iota {dimensions = array<i32: 1>} : vector<8x128xi32>
    %c0_3 = arith.constant 0 : index
    %c0_4 = arith.constant 0 : index
    %6 = vector.load %arg2[%c0_3, %c0_4] : memref<8x1xi32, #tpu.memory_space<vmem>>, vector<8x1xi32>
    %c128_i32 = arith.constant 128 : i32
    %7 = arith.muli %arg1, %c128_i32 : i32
    %8 = vector.broadcast %7 : i32 to vector<8x1xi32>
    %9 = arith.subi %6, %8 : vector<8x1xi32>
    %10 = vector.broadcast %9 : vector<8x1xi32> to vector<8x128xi32>
    %11 = arith.cmpi eq, %5, %10 : vector<8x128xi32>
    %c128_i32_5 = arith.constant 128 : i32
    %12 = arith.muli %arg1, %c128_i32_5 : i32
    %c200_i32 = arith.constant 200 : i32
    %13 = arith.subi %c200_i32, %12 : i32
    %14 = vector.broadcast %13 : i32 to vector<8x128xi32>
    %15 = arith.cmpi sge, %5, %14 : vector<8x128xi32>
    %16 = arith.ori %11, %15 : vector<8x128xi1>
    %cst = arith.constant 0xFF800000 : f32
    %17 = vector.broadcast %cst : f32 to vector<8x128xf32>
    %18 = arith.select %16, %17, %4 : vector<8x128xi1>, vector<8x128xf32>
    %c8_i32 = arith.constant 8 : i32
    %19 = arith.muli %arg0, %c8_i32 : i32
    %20 = tpu.iota {dimensions = array<i32: 0>} : vector<8x1xi32>
    %21 = vector.broadcast %19 : i32 to vector<8x1xi32>
    %22 = arith.addi %21, %20 : vector<8x1xi32>
    %c20_i32 = arith.constant 20 : i32
    %23 = vector.broadcast %c20_i32 : i32 to vector<8x1xi32>
    %24 = arith.cmpi slt, %22, %23 : vector<8x1xi32>
    %cst_6 = arith.constant 0.000000e+00 : f32
    %25 = vector.shape_cast %24 : vector<8x1xi1> to vector<8x1xi1>
    %26 = vector.broadcast %25 : vector<8x1xi1> to vector<8x128xi1>
    %27 = vector.broadcast %cst_6 : f32 to vector<8x128xf32>
    %28 = arith.select %26, %18, %27 : vector<8x128xi1>, vector<8x128xf32>
    %c0_7 = arith.constant 0 : index
    %c0_8 = arith.constant 0 : index
    %29 = vector.load %arg6[%c0_7, %c0_8] : memref<8x1xf32, #tpu.memory_space<vmem>>, vector<8x1xf32>
    %cst_9 = arith.constant dense<0xFF800000> : vector<8xf32>
    %30 = vector.multi_reduction <maximumf>, %28, %cst_9 [1] : vector<8x128xf32> to vector<8xf32>
    %31 = vector.shape_cast %30 : vector<8xf32> to vector<8x1xf32>
    %32 = arith.maximumf %29, %31 : vector<8x1xf32>
    %c0_10 = arith.constant 0 : index
    %c0_11 = arith.constant 0 : index
    %33 = vector.load %arg7[%c0_10, %c0_11] : memref<8x1xf32, #tpu.memory_space<vmem>>, vector<8x1xf32>
    %34 = arith.subf %29, %32 : vector<8x1xf32>
    %35 = math.exp %34 : vector<8x1xf32>
    %36 = arith.mulf %33, %35 : vector<8x1xf32>
    %37 = vector.broadcast %32 : vector<8x1xf32> to vector<8x128xf32>
    %38 = arith.subf %28, %37 : vector<8x128xf32>
    %39 = math.exp %38 : vector<8x128xf32>
    %cst_12 = arith.constant dense<0.000000e+00> : vector<8xf32>
    %40 = vector.multi_reduction <add>, %39, %cst_12 [1] : vector<8x128xf32> to vector<8xf32>
    %41 = vector.shape_cast %40 : vector<8xf32> to vector<8x1xf32>
    %42 = arith.addf %36, %41 : vector<8x1xf32>
    %c0_13 = arith.constant 0 : index
    %c0_14 = arith.constant 0 : index
    %43 = vector.load %arg7[%c0_13, %c0_14] : memref<8x1xf32, #tpu.memory_space<vmem>>, vector<8x1xf32>
    tpu.vector_store %arg7[%c0_13, %c0_14], %42 {strides = array<i32>} : memref<8x1xf32, #tpu.memory_space<vmem>>, vector<8x1xf32>,
    %c0_15 = arith.constant 0 : index
    %c0_16 = arith.constant 0 : index
    %44 = vector.load %arg6[%c0_15, %c0_16] : memref<8x1xf32, #tpu.memory_space<vmem>>, vector<8x1xf32>
    tpu.vector_store %arg6[%c0_15, %c0_16], %32 {strides = array<i32>} : memref<8x1xf32, #tpu.memory_space<vmem>>, vector<8x1xf32>,
    %c1_i32 = arith.constant 1 : i32
    %45 = arith.cmpi eq, %arg1, %c1_i32 : i32
    %46 = arith.extui %45 : i1 to i32
    %c0_i32_17 = arith.constant 0 : i32
    %47 = arith.cmpi ne, %46, %c0_i32_17 : i32
    scf.if %47 {
      %c0_18 = arith.constant 0 : index
      %c0_19 = arith.constant 0 : index
      %48 = vector.load %arg3[%c0_18, %c0_19] : memref<8x1xf32, #tpu.memory_space<vmem>>, vector<8x1xf32>
      %c0_20 = arith.constant 0 : index
      %c0_21 = arith.constant 0 : index
      %49 = vector.load %arg6[%c0_20, %c0_21] : memref<8x1xf32, #tpu.memory_space<vmem>>, vector<8x1xf32>
      %50 = arith.maximumf %49, %48 : vector<8x1xf32>
      %c0_22 = arith.constant 0 : index
      %c0_23 = arith.constant 0 : index
      %51 = vector.load %arg7[%c0_22, %c0_23] : memref<8x1xf32, #tpu.memory_space<vmem>>, vector<8x1xf32>
      %52 = arith.subf %49, %50 : vector<8x1xf32>
      %53 = math.exp %52 : vector<8x1xf32>
      %54 = arith.mulf %51, %53 : vector<8x1xf32>
      %55 = arith.subf %48, %50 : vector<8x1xf32>
      %56 = math.exp %55 : vector<8x1xf32>
      %57 = arith.addf %54, %56 : vector<8x1xf32>
      %58 = arith.subf %48, %50 : vector<8x1xf32>
      %59 = math.log %57 : vector<8x1xf32>
      %60 = arith.subf %58, %59 : vector<8x1xf32>
      %cst_24 = arith.constant 0.000000e+00 : f32
      %61 = vector.broadcast %cst_24 : f32 to vector<8x1xf32>
      %62 = arith.subf %61, %60 : vector<8x1xf32>
      %c8_i32_25 = arith.constant 8 : i32
      %63 = arith.muli %arg0, %c8_i32_25 : i32
      %64 = tpu.iota {dimensions = array<i32: 0>} : vector<8x1xi32>
      %65 = vector.broadcast %63 : i32 to vector<8x1xi32>
      %66 = arith.addi %65, %64 : vector<8x1xi32>
      %c20_i32_26 = arith.constant 20 : i32
      %67 = vector.broadcast %c20_i32_26 : i32 to vector<8x1xi32>
      %68 = arith.cmpi slt, %66, %67 : vector<8x1xi32>
      %cst_27 = arith.constant 0.000000e+00 : f32
      %69 = vector.broadcast %cst_27 : f32 to vector<8x1xf32>
      %70 = arith.select %68, %62, %69 : vector<8x1xi1>, vector<8x1xf32>
      %c0_28 = arith.constant 0 : index
      %c0_29 = arith.constant 0 : index
      %71 = vector.load %arg5[%c0_28, %c0_29] : memref<8x1xf32, #tpu.memory_space<vmem>>, vector<8x1xf32>
      tpu.vector_store %arg5[%c0_28, %c0_29], %70 {strides = array<i32>} : memref<8x1xf32, #tpu.memory_space<vmem>>, vector<8x1xf32>,
    } else {
    }
    return
  }
  func.func @transform_0(%arg0: i32, %arg1: i32) -> (i32, i32) {
    %c0_i32 = arith.constant 0 : i32
    %c0_i32_0 = arith.constant 0 : i32
    return %arg0, %c0_i32 : i32, i32
  }
  func.func @transform_1(%arg0: i32, %arg1: i32) -> (i32, i32) {
    %c0_i32 = arith.constant 0 : i32
    %c0_i32_0 = arith.constant 0 : i32
    return %arg0, %c0_i32 : i32, i32
  }
  func.func @transform_2(%arg0: i32, %arg1: i32) -> (i32, i32, i32) {
    %c0_i32 = arith.constant 0 : i32
    %c0_i32_0 = arith.constant 0 : i32
    return %c0_i32, %arg0, %arg1 : i32, i32, i32
  }
  func.func @transform_3(%arg0: i32, %arg1: i32) -> (i32, i32) {
    %c0_i32 = arith.constant 0 : i32
    %c0_i32_0 = arith.constant 0 : i32
    return %arg0, %c0_i32 : i32, i32
  }
}

</mosaic_0001>

<llo_original>
// kernel: tpu_custom_call.1
$region0: #{tpu_custom_call.1}
  #allocation0 [shape = 'u32[]', space=smem, size = 0x4, offset = 0x4, fixed_abs, tag = 'smem constant byte address 0x4 - core index']
  #allocation1 [shape = 'u32[72,128]{1,0:T(1,128)}', space=vmem, size = 0x9000, scoped, tag = 'internal scratch']
  #allocation2 [shape = 'f32[8,1]{1,0:T(8,128)}', space=vmem, size = 0x1000, scoped, tag = 'scratch operand']
  #allocation3 [shape = 'f32[8,1]{1,0:T(8,128)}', space=vmem, size = 0x1000, scoped, tag = 'scratch operand']
  %s0 = inlined_call_operand.vmem [shape: s32[24,1], index: 0, kind: input, shape index: {}]
  %s1 = inlined_call_operand.vmem [shape: f32[24,1], index: 1, kind: input, shape index: {}]
  %s2 = inlined_call_operand.vmem [shape: f32[2,20,200], index: 2, kind: input, shape index: {}]
  %s3 = inlined_call_operand.vmem [shape: f32[24,1], index: 3, kind: output, shape index: {}]
  %s4 = sld [smem:[#allocation0]]
  $region53: #{tpu_custom_call.1} parent=0
    _
  %s6 = ssub.s32 1, %s4
  %s7 = scalar_select 0, %s6, %s4
  loop: start=0, step=1, limit=8
  $region2: #{tpu_custom_call.1} parent=0 // loop_pre_header
    _
  $region3: #{tpu_custom_call.1} parent=0 // loop_header
    %s9 = sphi 0, %s13
    %p10 = scmp.ge.s32.totalorder %s9, 8
    %s16 = sphi 0, %s28
    %s17 = sphi 0, %s24
    %s18 = sphi 0, %s16
    %s19 = sphi 0, %s17
    %s20 = sphi 0, %s18
    %s21 = sphi 0, %s19
    %s31 = sphi 0, %s33
    %s34 = sphi 0, %s31
    %s35 = sphi 0, %s34
    %s51 = sphi 0, %s35
    %s57 = sphi 0, %s59
    %s60 = sphi 0, %s57
    %s61 = sphi 0, %s60
    %s77 = sphi 0, %s61
    %s85 = sphi 0, %s87
    %s88 = sphi 0, %s85
    %s89 = sphi 0, %s88
    %s105 = sphi 0, %s89
    %s111 = sphi 0, %s113
    %s114 = sphi 0, %s111
    %s115 = sphi 0, %s114
    %s131 = sphi 0, %s115
  $region4: #{tpu_custom_call.1} parent=0 // loop_header_branch
    %12 = sbr.rel (%p10) target = $region8
  $region5: #{tpu_custom_call.1} parent=0 // loop_body
    %s14 = ssub.s32 %s9, 1
    %s15 = ssub.s32 %s9, 2
    %s22 = sadd.s32 1, %s17
    %p23 = scmp.ge.s32.totalorder %s22, 2
    %s24 = scalar_select %p23, 0, %s22
    %s25 = sadd.s32 1, %s16
    %s26 = scalar_select %p23, %s25, %s16
    %p27 = scmp.ge.s32.totalorder %s26, 3
    %s28 = scalar_select %p27, 0, %s26
    %s29 = ssub.s32 %s16, %s28
    %p30 = scmp.eq.s32.totalorder %s29, 0
    %s32 = sadd.s32 %s31, 1
    %s33 = scalar_select %p30, %s31, %s32
    %p36 = pneg %p30
    %p37 = scmp.eq.s32.totalorder %s9, 5
    %p38 = por %p36, %p37
    %p39 = scmp.ne.s32.totalorder %s31, %s34
    %p40 = scmp.eq.s32.totalorder %s9, 0
    %p41 = por %p39, %p40
    %p42 = scmp.ne.s32.totalorder %s31, %s34
    %p43 = scmp.eq.s32.totalorder %s14, 5
    %p44 = por %p42, %p43
    %p45 = scmp.ne.s32.totalorder %s34, %s35
    %p46 = scmp.eq.s32.totalorder %s14, 0
    %p47 = por %p45, %p46
    %p48 = scmp.ne.s32.totalorder %s34, %s35
    %p49 = scmp.eq.s32.totalorder %s15, 5
    %p50 = por %p48, %p49
    %p52 = scmp.ne.s32.totalorder %s35, %s51
    %p53 = scmp.eq.s32.totalorder %s15, 0
    %p54 = por %p52, %p53
    %s55 = ssub.s32 %s16, %s28
    %p56 = scmp.eq.s32.totalorder %s55, 0
    %s58 = sadd.s32 %s57, 1
    %s59 = scalar_select %p56, %s57, %s58
    %p62 = pneg %p56
    %p63 = scmp.eq.s32.totalorder %s9, 5
    %p64 = por %p62, %p63
    %p65 = scmp.ne.s32.totalorder %s57, %s60
    %p66 = scmp.eq.s32.totalorder %s9, 0
    %p67 = por %p65, %p66
    %p68 = scmp.ne.s32.totalorder %s57, %s60
    %p69 = scmp.eq.s32.totalorder %s14, 5
    %p70 = por %p68, %p69
    %p71 = scmp.ne.s32.totalorder %s60, %s61
    %p72 = scmp.eq.s32.totalorder %s14, 0
    %p73 = por %p71, %p72
    %p74 = scmp.ne.s32.totalorder %s60, %s61
    %p75 = scmp.eq.s32.totalorder %s15, 5
    %p76 = por %p74, %p75
    %p78 = scmp.ne.s32.totalorder %s61, %s77
    %p79 = scmp.eq.s32.totalorder %s15, 0
    %p80 = por %p78, %p79
    %s81 = ssub.s32 %s16, %s28
    %s82 = ssub.s32 %s17, %s24
    %s83 = sor.u32 %s81, %s82
    %p84 = scmp.eq.s32.totalorder %s83, 0
    %s86 = sadd.s32 %s85, 1
    %s87 = scalar_select %p84, %s85, %s86
    %p90 = pneg %p84
    %p91 = scmp.eq.s32.totalorder %s9, 5
    %p92 = por %p90, %p91
    %p93 = scmp.ne.s32.totalorder %s85, %s88
    %p94 = scmp.eq.s32.totalorder %s9, 0
    %p95 = por %p93, %p94
    %p96 = scmp.ne.s32.totalorder %s85, %s88
    %p97 = scmp.eq.s32.totalorder %s14, 5
    %p98 = por %p96, %p97
    %p99 = scmp.ne.s32.totalorder %s88, %s89
    %p100 = scmp.eq.s32.totalorder %s14, 0
    %p101 = por %p99, %p100
    %p102 = scmp.ne.s32.totalorder %s88, %s89
    %p103 = scmp.eq.s32.totalorder %s15, 5
    %p104 = por %p102, %p103
    %p106 = scmp.ne.s32.totalorder %s89, %s105
    %p107 = scmp.eq.s32.totalorder %s15, 0
    %p108 = por %p106, %p107
    %s109 = ssub.s32 %s16, %s28
    %p110 = scmp.eq.s32.totalorder %s109, 0
    %s112 = sadd.s32 %s111, 1
    %s113 = scalar_select %p110, %s111, %s112
    %p116 = pneg %p110
    %p117 = scmp.eq.s32.totalorder %s9, 5
    %p118 = por %p116, %p117
    %p119 = scmp.ne.s32.totalorder %s111, %s114
    %p120 = scmp.eq.s32.totalorder %s9, 0
    %p121 = por %p119, %p120
    %p122 = scmp.ne.s32.totalorder %s111, %s114
    %p123 = scmp.eq.s32.totalorder %s14, 5
    %p124 = por %p122, %p123
    %p125 = scmp.ne.s32.totalorder %s114, %s115
    %p126 = scmp.eq.s32.totalorder %s14, 0
    %p127 = por %p125, %p126
    %p128 = scmp.ne.s32.totalorder %s114, %s115
    %p129 = scmp.eq.s32.totalorder %s15, 5
    %p130 = por %p128, %p129
    %p132 = scmp.ne.s32.totalorder %s115, %s131
    %p133 = scmp.eq.s32.totalorder %s15, 0
    %p134 = por %p132, %p133
    %p135 = scmp.le.s32.totalorder 1, %s9
    %p136 = scmp.lt.s32.totalorder %s9, 7
    %p137 = pnand %p135, %p136
    %p138 = pneg %p137
    // Predicated region
    $region9: #{tpu_custom_call.1} parent=5 // pred_check
      _
    $region10: #{tpu_custom_call.1} parent=5 // pred_check_branch
      %140 = sbr.rel (%p137) target = $region12
    $region11: #{tpu_custom_call.1} parent=5 // pred_region
      %s141 = ssub.s32 %s9, 1
    $region12: #{tpu_custom_call.1} parent=5 // pred_fallthru
      _
    %p142 = scmp.lt.s32.totalorder %s9, 6
    // Predicated region
    $region13: #{tpu_custom_call.1} parent=5 // pred_check
      %p143 = pneg %p142
    $region14: #{tpu_custom_call.1} parent=5 // pred_check_branch
      %145 = sbr.rel (%p143) target = $region16
    $region15: #{tpu_custom_call.1} parent=5 // pred_region
      // Predicated region
      $region17: #{tpu_custom_call.1} parent=15 // pred_check
        %p146 = pneg %p41
      $region18: #{tpu_custom_call.1} parent=15 // pred_check_branch
        %148 = sbr.rel (%p146) target = $region20
      $region19: #{tpu_custom_call.1} parent=15 // pred_region
        %p149 = scmp.lt.s32.totalorder %s16, 2
        %s150 = scalar_select %p149, %s16, 2
        %s151 = smul.addr %s150, 8
        %s152 = scalar_lea.vmem %s0, %s151
      $region20: #{tpu_custom_call.1} parent=15 // pred_fallthru
        _
      // Predicated region
      $region21: #{tpu_custom_call.1} parent=15 // pred_check
        %p153 = pneg %p67
      $region22: #{tpu_custom_call.1} parent=15 // pred_check_branch
        %155 = sbr.rel (%p153) target = $region24
      $region23: #{tpu_custom_call.1} parent=15 // pred_region
        %p156 = scmp.lt.s32.totalorder %s16, 2
        %s157 = scalar_select %p156, %s16, 2
        %s158 = smul.addr %s157, 8
        %s159 = scalar_lea.vmem %s1, %s158
      $region24: #{tpu_custom_call.1} parent=15 // pred_fallthru
        _
      // Predicated region
      $region25: #{tpu_custom_call.1} parent=15 // pred_check
        %p160 = pneg %p95
      $region26: #{tpu_custom_call.1} parent=15 // pred_check_branch
        %162 = sbr.rel (%p160) target = $region28
      $region27: #{tpu_custom_call.1} parent=15 // pred_region
        %p163 = scmp.lt.s32.totalorder %s16, 2
        %s164 = scalar_select %p163, %s16, 2
        %p165 = scmp.lt.s32.totalorder %s17, 1
        %s166 = scalar_select %p165, %s17, 1
        %s167 = smul.addr %s164, 2
        %s168 = sadd.s32 %s166, %s167
        %s169 = smul.addr %s168, 8
        %s170 = scalar_lea.vmem %s2, %s169
      $region28: #{tpu_custom_call.1} parent=15 // pred_fallthru
        _
    $region16: #{tpu_custom_call.1} parent=5 // pred_fallthru
      _
    %p171 = scmp.le.s32.totalorder 1, %s9
    %p172 = scmp.lt.s32.totalorder %s9, 7
    %p173 = pnand %p171, %p172
    %p174 = pneg %p173
    // Predicated region
    $region29: #{tpu_custom_call.1} parent=5 // pred_check
      _
    $region30: #{tpu_custom_call.1} parent=5 // pred_check_branch
      %176 = sbr.rel (%p173) target = $region32
    $region31: #{tpu_custom_call.1} parent=5 // pred_region
      %s177 = ssub.s32 %s9, 1
      %p178 = scmp.lt.s32.totalorder %s18, 2
      %s179 = scalar_select %p178, %s18, 2
      %s180 = smul.addr %s179, 8
      %s181 = scalar_lea.vmem %s0, %s180
      %p182 = pneg %p47
      %p183 = pneg %p44
      %p184 = scmp.lt.s32.totalorder %s18, 2
      %s185 = scalar_select %p184, %s18, 2
      %s186 = smul.addr %s185, 8
      %s187 = scalar_lea.vmem %s1, %s186
      %p188 = pneg %p73
      %p189 = pneg %p70
      %p190 = scmp.lt.s32.totalorder %s18, 2
      %s191 = scalar_select %p190, %s18, 2
      %p192 = scmp.lt.s32.totalorder %s19, 1
      %s193 = scalar_select %p192, %s19, 1
      %s194 = smul.addr %s191, 2
      %s195 = sadd.s32 %s193, %s194
      %s196 = smul.addr %s195, 8
      %s197 = scalar_lea.vmem %s2, %s196
      %p198 = pneg %p101
      %p199 = pneg %p98
      %p200 = pneg %p127
      %p201 = pneg %p124
      %p202 = scmp.lt.s32.totalorder %s18, 2
      %s203 = scalar_select %p202, %s18, 2
      %s204 = smul.addr %s203, 8
      %s205 = scalar_lea.vmem %s3, %s204
      %p206 = scmp.lt.s32.totalorder %s18, 2
      %s207 = scalar_select %p206, %s18, 2
      %s208 = smul.addr %s207, 8
      %s209 = scalar_lea.vmem %s0, %s208
      %p210 = scmp.lt.s32.totalorder %s18, 2
      %s211 = scalar_select %p210, %s18, 2
      %s212 = smul.addr %s211, 8
      %s213 = scalar_lea.vmem %s1, %s212
      %p214 = scmp.lt.s32.totalorder %s18, 2
      %s215 = scalar_select %p214, %s18, 2
      %p216 = scmp.lt.s32.totalorder %s19, 1
      %s217 = scalar_select %p216, %s19, 1
      %s218 = smul.addr %s215, 2
      %s219 = sadd.s32 %s217, %s218
      %s220 = smul.addr %s219, 8
      %s221 = scalar_lea.vmem %s2, %s220
      %p222 = scmp.lt.s32.totalorder %s18, 2
      %s223 = scalar_select %p222, %s18, 2
      %s224 = smul.addr %s223, 8
      %s225 = scalar_lea.vmem %s3, %s224
      %p226 = scmp.eq.s32.totalorder %s19, 0
      // Predicated region
      $region33: #{tpu_custom_call.1} parent=31 // pred_check
        %p227 = pneg %p226
      $region34: #{tpu_custom_call.1} parent=31 // pred_check_branch
        %229 = sbr.rel (%p227) target = $region36
      $region35: #{tpu_custom_call.1} parent=31 // pred_region
        %vm230 = vcmask 7168
        %231 = vst.msk [vmem:[#allocation2] sm:$0xff] %vm230, -3e+38
        %232 = vst.msk [vmem:[#allocation3] sm:$0xff] %vm230, 0.0
      $region36: #{tpu_custom_call.1} parent=31 // pred_fallthru
        _
      %v233 = vld [vmem:[%s221] sm:$0xff]
      %v234 = vlaneseq
      %v235 = vand.u32 %v234, 127
      %v236 = vld [vmem:[%s209] sm:$0xff]
      %s237 = smul.u32 %s19, 128
      %v238 = vstv %s237
      %v239 = vsub.s32 %v236, %v238
      %240 = vset.pattern.permute.xlu0 0
      %241 = vperm.xlu0 %240, %v239
      %v242 = vpop.permute.xlu0 %241
      %vm243 = vcmp.eq.s32.totalorder %v235, %v242
      %s244 = ssub.s32 200, %s237
      %v245 = vstv %s244
      %vm246 = vcmp.ge.s32.totalorder %v235, %v245
      %vm247 = vmor %vm243, %vm246
      %v248 = vsel %vm247, -inf, %v233
      %s249 = smul.u32 %s18, 8
      %v250 = vlaneseq
      %v251 = vshrl.u32 %v250, 7
      %v252 = vstv %s249
      %v253 = vadd.s32 %v252, %v251
      %vm254 = vcmp.lt.s32.totalorder %v253, 20
      %v255 = vsel %vm254, 1, 0
      %vm256 = vcmp.eq.s32.totalorder %v255, 1
      %v257 = vsel %vm256, %v248, 0.0
      %v258 = vld [vmem:[#allocation2] sm:$0xff]
      %259 = vmax.xlane.f32.xlu0 %v257
      %v260 = vpop.xlane.xlu0 %259
      %v261 = vmax.f32 %v258, %v260
      %v262 = vld [vmem:[#allocation3] sm:$0xff]
      %v263 = vsub.f32 %v258, %v261
      %v264 = vmul.f32 %v263, 1.442695
      %v265 = vpow.pop %v264
      %v266 = vmul.f32 %v262, %v265
      %268 = vset.pattern.permute.xlu0 0
      %269 = vperm.xlu0 %268, %v261
      %v270 = vpop.permute.xlu0 %269
      %v272 = vsub.f32 %v257, %v270
      %v273 = vmul.f32 %v272, 1.442695
      %v274 = vpow.pop %v273
      %275 = vadd.xlane.f32.xlu0 %v274
      %v276 = vpop.xlane.xlu0 %275
      %v277 = vadd.f32 %v266, %v276
      %vm278 = vcmask 7168
      %279 = vst.msk [vmem:[#allocation3] sm:$0xff] %vm278, %v277
      %280 = vst.msk [vmem:[#allocation2] sm:$0xff] %vm278, %v261
      %p281 = scmp.eq.s32.totalorder %s19, 1
      // Predicated region
      $region37: #{tpu_custom_call.1} parent=31 // pred_check
        %p282 = pneg %p281
      $region38: #{tpu_custom_call.1} parent=31 // pred_check_branch
        %284 = sbr.rel (%p282) target = $region40
      $region39: #{tpu_custom_call.1} parent=31 // pred_region
        %v285 = vld [vmem:[%s213] sm:$0xff]
        %v286 = vld [vmem:[#allocation2] sm:$0xff]
        %v287 = vmax.f32 %v286, %v285
        %v288 = vld [vmem:[#allocation3] sm:$0xff]
        %v289 = vsub.f32 %v286, %v287
        %v290 = vmul.f32 %v289, 1.442695
        %v291 = vpow.pop %v290
        %v292 = vmul.f32 %v288, %v291
        %v293 = vsub.f32 %v285, %v287
        %v294 = vmul.f32 %v293, 1.442695
        %v295 = vpow.pop %v294
        %v296 = vadd.f32 %v292, %v295
        %v297 = vlog2.pop %v296
        %v298 = vmul.f32 %v297, 0.6931472
        %v299 = vsub.f32 %v293, %v298
        %v300 = vsub.f32 0.0, %v299
        %v301 = vsel %vm254, %v300, 0.0
        %302 = vst.msk [vmem:[%s225] sm:$0xff] %vm278, %v301
      $region40: #{tpu_custom_call.1} parent=31 // pred_fallthru
        _
      %p303 = scmp.lt.s32.totalorder %s18, 2
      %s304 = scalar_select %p303, %s18, 2
      %s305 = smul.addr %s304, 8
      %s306 = scalar_lea.vmem %s3, %s305
      // Predicated region
      $region41: #{tpu_custom_call.1} parent=31 // pred_check
        %p307 = pneg %p124
      $region42: #{tpu_custom_call.1} parent=31 // pred_check_branch
        %309 = sbr.rel (%p307) target = $region44
      $region43: #{tpu_custom_call.1} parent=31 // pred_region
        _
      $region44: #{tpu_custom_call.1} parent=31 // pred_fallthru
        _
    $region32: #{tpu_custom_call.1} parent=5 // pred_fallthru
      _
    %p310 = scmp.le.s32.totalorder 2, %s9
    // Predicated region
    $region45: #{tpu_custom_call.1} parent=5 // pred_check
      %p311 = pneg %p310
    $region46: #{tpu_custom_call.1} parent=5 // pred_check_branch
      %313 = sbr.rel (%p311) target = $region48
    $region47: #{tpu_custom_call.1} parent=5 // pred_region
      %s314 = ssub.s32 %s9, 2
      // Predicated region
      $region49: #{tpu_custom_call.1} parent=47 // pred_check
        %p315 = pneg %p130
      $region50: #{tpu_custom_call.1} parent=47 // pred_check_branch
        %317 = sbr.rel (%p315) target = $region52
      $region51: #{tpu_custom_call.1} parent=47 // pred_region
        %p318 = scmp.lt.s32.totalorder %s20, 2
        %s319 = scalar_select %p318, %s20, 2
        %s320 = smul.addr %s319, 8
        %s321 = scalar_lea.vmem %s3, %s320
      $region52: #{tpu_custom_call.1} parent=47 // pred_fallthru
        _
    $region48: #{tpu_custom_call.1} parent=5 // pred_fallthru
      _
  $region6: #{tpu_custom_call.1} parent=0 // loop_footer
    %s13 = sadd.s32 1, %s9
  $region7: #{tpu_custom_call.1} parent=0 // loop_footer_branch
    %8 = sbr.rel target = $region3
  $region8: #{tpu_custom_call.1} parent=0 // loop_exit
    _

</llo_original>
